<compile_context>
chip_gen: v7x
topology: tpu7x:2x2x1
jax: 0.10.0
libtpu: 0.0.40
codegen_flags: <defaults>
</compile_context>

<pallas_src>
import functools

import jax
import jax.numpy as jnp
from jax.experimental import pallas as pl
from jax.experimental.pallas import tpu as pltpu


LANES = 128
SUBLANES = 8
SLAB = SUBLANES * LANES          # element counts padded to a multiple of this
NUM_CORES = 2                    # leading "parallel" grid axis (v7x megacore)
_PALLAS_MIN_ELEMS = 1 << 20      # below this, plain jnp beats pallas_call fixed cost


def _tile_config():
    """(max_block_rows, vmem_limit_bytes) chosen per TPU generation."""
    vmem_cap = None
    try:
        info = pltpu.get_tpu_info()
        vmem_cap = getattr(info, "vmem_capacity_bytes", None)
    except Exception:
        vmem_cap = None
    if vmem_cap is not None and vmem_cap >= 96 * 1024 * 1024:
        # v5e / v6e: 128 MiB physical VMEM -> 4 MiB f32 blocks,
        # 4 inputs x 2 pipeline buffers = 32 MiB working set.
        return 8192, 64 * 1024 * 1024
    # v7x (64 MiB per TensorCore) or unknown: stay conservative.
    return 4096, 48 * 1024 * 1024


def _to_slab(x):
    """Flatten to a lane-dense (groups, 8, 128) slab.

    Zero-pads BOTH pred and true identically (invariant relied upon for
    correctness): padded elements contribute |0 - 0| = 0, so only the OOB
    grid-padding row-groups of a ragged last block need excluding, which the
    kernel does with a static slice.
    """
    flat = x.reshape(-1)
    n = flat.shape[0]
    padded = ((n + SLAB - 1) // SLAB) * SLAB
    if padded != n:
        flat = jnp.pad(flat, (0, padded - n))
    return flat.reshape(padded // SLAB, SUBLANES, LANES), n


def _accum(pred_ref, true_ref, acc_ref, block_groups, tail_groups, is_last):
    """acc(8,128) += per-(sublane,lane) sums of |pred - true| for this block."""

    def add(gr):  # gr: static number of valid row-groups in this block
        d = jnp.abs(pred_ref[0:gr].astype(jnp.float32)
                    - true_ref[0:gr].astype(jnp.float32))
        acc_ref[...] += jnp.sum(d, axis=0)

    if tail_groups == block_groups:      # static: segment has no ragged block
        add(block_groups)
    else:                                # pay for the short path only on the last block
        @pl.when(is_last)
        def _():
            add(tail_groups)

        @pl.when(jnp.logical_not(is_last))
        def _():
            add(block_groups)


def _make_kernel(blocks_y, gby, y_tail, blocks_s, gbs, s_tail, total_blocks, inner):
    def kernel(yp_ref, yt_ref, sp_ref, st_ref, oy_ref, os_ref, acc_y, acc_s):
        c = pl.program_id(0)
        i = pl.program_id(1)
        g = i * NUM_CORES + c            # global block id, interleaved across cores

        @pl.when(i == 0)
        def _():
            acc_y[...] = jnp.zeros_like(acc_y)
            acc_s[...] = jnp.zeros_like(acc_s)

        @pl.when(g < blocks_y)
        def _():
            _accum(yp_ref, yt_ref, acc_y, gby, y_tail, g == blocks_y - 1)

        @pl.when(jnp.logical_and(g >= blocks_y, g < total_blocks))
        def _():
            _accum(sp_ref, st_ref, acc_s, gbs, s_tail, g == total_blocks - 1)

        @pl.when(i == inner - 1)
        def _():
            oy_ref[...] = acc_y[...]
            os_ref[...] = acc_s[...]

    return kernel


def _fused_l1_means(y_pred, y_true, sil_pred, sil_true, max_block_rows=None):
    """Returns (mean|y_pred-y_true|, mean|sil_pred-sil_true|) via one kernel."""
    yp, n_y = _to_slab(y_pred)
    yt, _ = _to_slab(y_true)
    sp, n_s = _to_slab(sil_pred)
    st, _ = _to_slab(sil_true)

    auto_rows, vmem_limit = _tile_config()
    rows = auto_rows if max_block_rows is None else max(SUBLANES, max_block_rows)
    max_groups = max(1, rows // SUBLANES)

    groups_y, groups_s = yp.shape[0], sp.shape[0]
    gby = min(groups_y, max_groups)
    gbs = min(groups_s, max_groups)
    blocks_y = pl.cdiv(groups_y, gby)
    blocks_s = pl.cdiv(groups_s, gbs)
    total_blocks = blocks_y + blocks_s
    inner = pl.cdiv(total_blocks, NUM_CORES)

    y_tail = groups_y - (blocks_y - 1) * gby   # valid row-groups in last y block
    s_tail = groups_s - (blocks_s - 1) * gbs

    def y_map(c, i):
        g = i * NUM_CORES + c
        # During the sil phase, pin to this core's own last y block -> no re-fetch.
        last_y = blocks_y - 1 - ((blocks_y - 1 + c) % NUM_CORES)
        return jnp.clip(jnp.minimum(g, last_y), 0, blocks_y - 1), 0, 0

    def s_map(c, i):
        g = i * NUM_CORES + c
        # During the y phase, pin to this core's FIRST sil block (acts as prefetch).
        first_s = (c + blocks_y) % NUM_CORES
        return jnp.clip(jnp.maximum(g - blocks_y, first_s), 0, blocks_s - 1), 0, 0

    out_map = lambda c, i: (c, 0)

    sum_y, sum_s = pl.pallas_call(
        _make_kernel(blocks_y, gby, y_tail, blocks_s, gbs, s_tail,
                     total_blocks, inner),
        out_shape=(
            jax.ShapeDtypeStruct((NUM_CORES * SUBLANES, LANES), jnp.float32),
            jax.ShapeDtypeStruct((NUM_CORES * SUBLANES, LANES), jnp.float32),
        ),
        grid_spec=pltpu.PrefetchScalarGridSpec(
            num_scalar_prefetch=0,
            grid=(NUM_CORES, inner),
            in_specs=[
                pl.BlockSpec((gby, SUBLANES, LANES), y_map),
                pl.BlockSpec((gby, SUBLANES, LANES), y_map),
                pl.BlockSpec((gbs, SUBLANES, LANES), s_map),
                pl.BlockSpec((gbs, SUBLANES, LANES), s_map),
            ],
            out_specs=[
                pl.BlockSpec((SUBLANES, LANES), out_map),
                pl.BlockSpec((SUBLANES, LANES), out_map),
            ],
            scratch_shapes=[
                pltpu.VMEM((SUBLANES, LANES), jnp.float32),
                pltpu.VMEM((SUBLANES, LANES), jnp.float32),
            ],
        ),
        compiler_params=pltpu.CompilerParams(
            dimension_semantics=("parallel", "arbitrary"),
            vmem_limit_bytes=vmem_limit,
        ),
    )(yp, yt, sp, st)

    # Tiny epilogue: cross-core/cross-lane reduce + mean in plain JAX.
    l1_y = jnp.sum(sum_y) / jnp.float32(n_y)
    l1_s = jnp.sum(sum_s) / jnp.float32(n_s)
    return l1_y, l1_s


@functools.partial(jax.jit, static_argnames=("force_pallas",))
def loss_forward(weight, sil_pred, sil_true, y_pred, y_true, force_pallas=False):
    """Pallas-backed equivalent of Loss.forward."""
    n_total = y_pred.size + sil_pred.size
    if force_pallas or n_total >= _PALLAS_MIN_ELEMS:
        l1_y, l1_sil = _fused_l1_means(y_pred, y_true, sil_pred, sil_true)
    else:
        # Small-input fast path: XLA's fused reduction beats the pallas_call
        # fixed cost at these sizes.
        l1_y = jnp.mean(jnp.abs(y_pred.astype(jnp.float32)
                                - y_true.astype(jnp.float32)))
        l1_sil = jnp.mean(jnp.abs(sil_pred.astype(jnp.float32)
                                  - sil_true.astype(jnp.float32)))
    return weight[0] * l1_y + weight[1] * l1_sil


if __name__ == "__main__":
    key = jax.random.PRNGKey(0)
    k1, k2, k3, k4, k5, k6, k7, k8 = jax.random.split(key, 8)

    # Small NCHW shapes consistent with the module: 4-channel prediction,
    # 1-channel silhouette.
    y_pred = jax.random.normal(k1, (2, 4, 16, 16), dtype=jnp.float32)
    y_true = jax.random.normal(k2, (2, 4, 16, 16), dtype=jnp.float32)
    sil_pred = jax.random.normal(k3, (2, 1, 16, 16), dtype=jnp.float32)
    sil_true = jax.random.normal(k4, (2, 1, 16, 16), dtype=jnp.float32)
    weight = jnp.array([0.7, 0.3], dtype=jnp.float32)

    # Force the Pallas path so the kernel is exercised at demo sizes.
    out = loss_forward(weight, sil_pred, sil_true, y_pred, y_true,
                       force_pallas=True)
    out = jax.block_until_ready(out)

    ref = (weight[0] * jnp.mean(jnp.abs(y_pred - y_true))
           + weight[1] * jnp.mean(jnp.abs(sil_pred - sil_true)))
    assert jnp.allclose(out, ref, rtol=1e-5, atol=1e-6), (out, ref)

    # Also exercise the multi-block ragged-tail path and the lane/row padding
    # path with a tiny block-size override.
    y2p = jax.random.normal(k5, (2, 4, 16, 24), dtype=jnp.float32)   # 3072 elems
    y2t = jax.random.normal(k6, (2, 4, 16, 24), dtype=jnp.float32)
    s2p = jax.random.normal(k7, (2, 1, 17, 23), dtype=jnp.float32)   # 782 elems
    s2t = jax.random.normal(k8, (2, 1, 17, 23), dtype=jnp.float32)
    l1_y2, l1_s2 = _fused_l1_means(y2p, y2t, s2p, s2t, max_block_rows=16)
    l1_y2, l1_s2 = jax.block_until_ready((l1_y2, l1_s2))
    assert jnp.allclose(l1_y2, jnp.mean(jnp.abs(y2p - y2t)), rtol=1e-5, atol=1e-6)
    assert jnp.allclose(l1_s2, jnp.mean(jnp.abs(s2p - s2t)), rtol=1e-5, atol=1e-6)

    print("KERNEL_OK")
</pallas_src>

<mosaic_0001>
module attributes {stable_mosaic.version = 11 : i64} {
  func.func @kernel(%arg0: i32, %arg1: i32, %arg2: memref<2x8x128xf32, #tpu.memory_space<vmem>>, %arg3: memref<2x8x128xf32, #tpu.memory_space<vmem>>, %arg4: memref<1x8x128xf32, #tpu.memory_space<vmem>>, %arg5: memref<1x8x128xf32, #tpu.memory_space<vmem>>, %arg6: memref<8x128xf32, #tpu.memory_space<vmem>>, %arg7: memref<8x128xf32, #tpu.memory_space<vmem>>, %arg8: memref<8x128xf32, #tpu.memory_space<vmem>>, %arg9: memref<8x128xf32, #tpu.memory_space<vmem>>) attributes {dimension_semantics = [#tpu.dimension_semantics<parallel>, #tpu.dimension_semantics<arbitrary>], iteration_bounds = array<i64: 2, 1>, scalar_prefetch = 0 : i64, scratch_operands = 2 : i64, tpu.core_type = #tpu.core_type<tc>, window_params = [{transform_indices = @transform_0, window_bounds = array<i64: 2, 8, 128>}, {transform_indices = @transform_1, window_bounds = array<i64: 2, 8, 128>}, {transform_indices = @transform_2, window_bounds = array<i64: 1, 8, 128>}, {transform_indices = @transform_3, window_bounds = array<i64: 1, 8, 128>}, {transform_indices = @transform_4, window_bounds = array<i64: 8, 128>}, {transform_indices = @transform_5, window_bounds = array<i64: 8, 128>}]} {
    %c2_i32 = arith.constant 2 : i32
    %0 = arith.muli %arg1, %c2_i32 : i32
    %1 = arith.addi %0, %arg0 : i32
    %c0_i32 = arith.constant 0 : i32
    %2 = arith.cmpi eq, %arg1, %c0_i32 : i32
    %3 = arith.extui %2 : i1 to i32
    %c0_i32_0 = arith.constant 0 : i32
    %4 = arith.cmpi ne, %3, %c0_i32_0 : i32
    scf.if %4 {
      %cst = arith.constant 0.000000e+00 : f32
      %16 = vector.broadcast %cst : f32 to vector<8x128xf32>
      %c0 = arith.constant 0 : index
      %c0_7 = arith.constant 0 : index
      %17 = vector.load %arg8[%c0, %c0_7] : memref<8x128xf32, #tpu.memory_space<vmem>>, vector<8x128xf32>
      tpu.vector_store %arg8[%c0, %c0_7], %16 {strides = array<i32>} : memref<8x128xf32, #tpu.memory_space<vmem>>, vector<8x128xf32>,
      %cst_8 = arith.constant 0.000000e+00 : f32
      %18 = vector.broadcast %cst_8 : f32 to vector<8x128xf32>
      %c0_9 = arith.constant 0 : index
      %c0_10 = arith.constant 0 : index
      %19 = vector.load %arg9[%c0_9, %c0_10] : memref<8x128xf32, #tpu.memory_space<vmem>>, vector<8x128xf32>
      tpu.vector_store %arg9[%c0_9, %c0_10], %18 {strides = array<i32>} : memref<8x128xf32, #tpu.memory_space<vmem>>, vector<8x128xf32>,
    } else {
    }
    %c1_i32 = arith.constant 1 : i32
    %5 = arith.cmpi slt, %1, %c1_i32 : i32
    %6 = arith.extui %5 : i1 to i32
    %c0_i32_1 = arith.constant 0 : i32
    %7 = arith.cmpi ne, %6, %c0_i32_1 : i32
    scf.if %7 {
      %c0 = arith.constant 0 : index
      %c0_7 = arith.constant 0 : index
      %c0_8 = arith.constant 0 : index
      %16 = vector.load %arg2[%c0, %c0_7, %c0_8] : memref<2x8x128xf32, #tpu.memory_space<vmem>>, vector<2x8x128xf32>
      %c0_9 = arith.constant 0 : index
      %c0_10 = arith.constant 0 : index
      %c0_11 = arith.constant 0 : index
      %17 = vector.load %arg3[%c0_9, %c0_10, %c0_11] : memref<2x8x128xf32, #tpu.memory_space<vmem>>, vector<2x8x128xf32>
      %18 = arith.subf %16, %17 : vector<2x8x128xf32>
      %19 = math.absf %18 : vector<2x8x128xf32>
      %c0_12 = arith.constant 0 : index
      %c0_13 = arith.constant 0 : index
      %20 = vector.load %arg8[%c0_12, %c0_13] : memref<8x128xf32, #tpu.memory_space<vmem>>, vector<8x128xf32>
      %cst = arith.constant dense<0.000000e+00> : vector<8x128xf32>
      %21 = vector.multi_reduction <add>, %19, %cst [0] : vector<2x8x128xf32> to vector<8x128xf32>
      %22 = arith.addf %20, %21 : vector<8x128xf32>
      %c0_14 = arith.constant 0 : index
      %c0_15 = arith.constant 0 : index
      %23 = vector.load %arg8[%c0_14, %c0_15] : memref<8x128xf32, #tpu.memory_space<vmem>>, vector<8x128xf32>
      tpu.vector_store %arg8[%c0_14, %c0_15], %22 {strides = array<i32>} : memref<8x128xf32, #tpu.memory_space<vmem>>, vector<8x128xf32>,
    } else {
    }
    %c1_i32_2 = arith.constant 1 : i32
    %8 = arith.cmpi sge, %1, %c1_i32_2 : i32
    %c2_i32_3 = arith.constant 2 : i32
    %9 = arith.cmpi slt, %1, %c2_i32_3 : i32
    %10 = arith.andi %8, %9 : i1
    %11 = arith.extui %10 : i1 to i32
    %c0_i32_4 = arith.constant 0 : i32
    %12 = arith.cmpi ne, %11, %c0_i32_4 : i32
    scf.if %12 {
      %c0 = arith.constant 0 : index
      %c0_7 = arith.constant 0 : index
      %c0_8 = arith.constant 0 : index
      %16 = vector.load %arg4[%c0, %c0_7, %c0_8] : memref<1x8x128xf32, #tpu.memory_space<vmem>>, vector<1x8x128xf32>
      %c0_9 = arith.constant 0 : index
      %c0_10 = arith.constant 0 : index
      %c0_11 = arith.constant 0 : index
      %17 = vector.load %arg5[%c0_9, %c0_10, %c0_11] : memref<1x8x128xf32, #tpu.memory_space<vmem>>, vector<1x8x128xf32>
      %18 = arith.subf %16, %17 : vector<1x8x128xf32>
      %19 = math.absf %18 : vector<1x8x128xf32>
      %c0_12 = arith.constant 0 : index
      %c0_13 = arith.constant 0 : index
      %20 = vector.load %arg9[%c0_12, %c0_13] : memref<8x128xf32, #tpu.memory_space<vmem>>, vector<8x128xf32>
      %cst = arith.constant dense<0.000000e+00> : vector<8x128xf32>
      %21 = vector.multi_reduction <add>, %19, %cst [0] : vector<1x8x128xf32> to vector<8x128xf32>
      %22 = arith.addf %20, %21 : vector<8x128xf32>
      %c0_14 = arith.constant 0 : index
      %c0_15 = arith.constant 0 : index
      %23 = vector.load %arg9[%c0_14, %c0_15] : memref<8x128xf32, #tpu.memory_space<vmem>>, vector<8x128xf32>
      tpu.vector_store %arg9[%c0_14, %c0_15], %22 {strides = array<i32>} : memref<8x128xf32, #tpu.memory_space<vmem>>, vector<8x128xf32>,
    } else {
    }
    %c0_i32_5 = arith.constant 0 : i32
    %13 = arith.cmpi eq, %arg1, %c0_i32_5 : i32
    %14 = arith.extui %13 : i1 to i32
    %c0_i32_6 = arith.constant 0 : i32
    %15 = arith.cmpi ne, %14, %c0_i32_6 : i32
    scf.if %15 {
      %c0 = arith.constant 0 : index
      %c0_7 = arith.constant 0 : index
      %16 = vector.load %arg8[%c0, %c0_7] : memref<8x128xf32, #tpu.memory_space<vmem>>, vector<8x128xf32>
      %c0_8 = arith.constant 0 : index
      %c0_9 = arith.constant 0 : index
      %17 = vector.load %arg6[%c0_8, %c0_9] : memref<8x128xf32, #tpu.memory_space<vmem>>, vector<8x128xf32>
      tpu.vector_store %arg6[%c0_8, %c0_9], %16 {strides = array<i32>} : memref<8x128xf32, #tpu.memory_space<vmem>>, vector<8x128xf32>,
      %c0_10 = arith.constant 0 : index
      %c0_11 = arith.constant 0 : index
      %18 = vector.load %arg9[%c0_10, %c0_11] : memref<8x128xf32, #tpu.memory_space<vmem>>, vector<8x128xf32>
      %c0_12 = arith.constant 0 : index
      %c0_13 = arith.constant 0 : index
      %19 = vector.load %arg7[%c0_12, %c0_13] : memref<8x128xf32, #tpu.memory_space<vmem>>, vector<8x128xf32>
      tpu.vector_store %arg7[%c0_12, %c0_13], %18 {strides = array<i32>} : memref<8x128xf32, #tpu.memory_space<vmem>>, vector<8x128xf32>,
    } else {
    }
    return
  }
  func.func @transform_0(%arg0: i32, %arg1: i32) -> (i32, i32, i32) {
    %c2_i32 = arith.constant 2 : i32
    %0 = arith.muli %arg1, %c2_i32 : i32
    %1 = arith.addi %0, %arg0 : i32
    %c0_i32 = arith.constant 0 : i32
    %2 = arith.addi %c0_i32, %arg0 : i32
    %c2_i32_0 = arith.constant 2 : i32
    %c0_i32_1 = arith.constant 0 : i32
    %3 = arith.cmpi eq, %c2_i32_0, %c0_i32_1 : i32
    %c1_i32 = arith.constant 1 : i32
    %4 = arith.select %3, %c1_i32, %c2_i32_0 : i32
    %5 = arith.remsi %2, %4 : i32
    %c0_i32_2 = arith.constant 0 : i32
    %6 = arith.cmpi ne, %5, %c0_i32_2 : i32
    %c0_i32_3 = arith.constant 0 : i32
    %7 = arith.cmpi slt, %5, %c0_i32_3 : i32
    %c0_i32_4 = arith.constant 0 : i32
    %8 = arith.cmpi slt, %4, %c0_i32_4 : i32
    %9 = arith.xori %7, %8 : i1
    %10 = arith.andi %9, %6 : i1
    %11 = arith.addi %5, %4 : i32
    %12 = arith.select %10, %11, %5 : i32
    %c0_i32_5 = arith.constant 0 : i32
    %13 = arith.subi %c0_i32_5, %12 : i32
    %14 = arith.minsi %1, %13 : i32
    %c0_i32_6 = arith.constant 0 : i32
    %c0_i32_7 = arith.constant 0 : i32
    %15 = arith.maxsi %c0_i32_6, %14 : i32
    %16 = arith.minsi %c0_i32_7, %15 : i32
    %c0_i32_8 = arith.constant 0 : i32
    %c0_i32_9 = arith.constant 0 : i32
    %c0_i32_10 = arith.constant 0 : i32
    return %16, %c0_i32_8, %c0_i32_9 : i32, i32, i32
  }
  func.func @transform_1(%arg0: i32, %arg1: i32) -> (i32, i32, i32) {
    %c2_i32 = arith.constant 2 : i32
    %0 = arith.muli %arg1, %c2_i32 : i32
    %1 = arith.addi %0, %arg0 : i32
    %c0_i32 = arith.constant 0 : i32
    %2 = arith.addi %c0_i32, %arg0 : i32
    %c2_i32_0 = arith.constant 2 : i32
    %c0_i32_1 = arith.constant 0 : i32
    %3 = arith.cmpi eq, %c2_i32_0, %c0_i32_1 : i32
    %c1_i32 = arith.constant 1 : i32
    %4 = arith.select %3, %c1_i32, %c2_i32_0 : i32
    %5 = arith.remsi %2, %4 : i32
    %c0_i32_2 = arith.constant 0 : i32
    %6 = arith.cmpi ne, %5, %c0_i32_2 : i32
    %c0_i32_3 = arith.constant 0 : i32
    %7 = arith.cmpi slt, %5, %c0_i32_3 : i32
    %c0_i32_4 = arith.constant 0 : i32
    %8 = arith.cmpi slt, %4, %c0_i32_4 : i32
    %9 = arith.xori %7, %8 : i1
    %10 = arith.andi %9, %6 : i1
    %11 = arith.addi %5, %4 : i32
    %12 = arith.select %10, %11, %5 : i32
    %c0_i32_5 = arith.constant 0 : i32
    %13 = arith.subi %c0_i32_5, %12 : i32
    %14 = arith.minsi %1, %13 : i32
    %c0_i32_6 = arith.constant 0 : i32
    %c0_i32_7 = arith.constant 0 : i32
    %15 = arith.maxsi %c0_i32_6, %14 : i32
    %16 = arith.minsi %c0_i32_7, %15 : i32
    %c0_i32_8 = arith.constant 0 : i32
    %c0_i32_9 = arith.constant 0 : i32
    %c0_i32_10 = arith.constant 0 : i32
    return %16, %c0_i32_8, %c0_i32_9 : i32, i32, i32
  }
  func.func @transform_2(%arg0: i32, %arg1: i32) -> (i32, i32, i32) {
    %c2_i32 = arith.constant 2 : i32
    %0 = arith.muli %arg1, %c2_i32 : i32
    %1 = arith.addi %0, %arg0 : i32
    %c1_i32 = arith.constant 1 : i32
    %2 = arith.addi %arg0, %c1_i32 : i32
    %c2_i32_0 = arith.constant 2 : i32
    %c0_i32 = arith.constant 0 : i32
    %3 = arith.cmpi eq, %c2_i32_0, %c0_i32 : i32
    %c1_i32_1 = arith.constant 1 : i32
    %4 = arith.select %3, %c1_i32_1, %c2_i32_0 : i32
    %5 = arith.remsi %2, %4 : i32
    %c0_i32_2 = arith.constant 0 : i32
    %6 = arith.cmpi ne, %5, %c0_i32_2 : i32
    %c0_i32_3 = arith.constant 0 : i32
    %7 = arith.cmpi slt, %5, %c0_i32_3 : i32
    %c0_i32_4 = arith.constant 0 : i32
    %8 = arith.cmpi slt, %4, %c0_i32_4 : i32
    %9 = arith.xori %7, %8 : i1
    %10 = arith.andi %9, %6 : i1
    %11 = arith.addi %5, %4 : i32
    %12 = arith.select %10, %11, %5 : i32
    %c1_i32_5 = arith.constant 1 : i32
    %13 = arith.subi %1, %c1_i32_5 : i32
    %14 = arith.maxsi %13, %12 : i32
    %c0_i32_6 = arith.constant 0 : i32
    %c0_i32_7 = arith.constant 0 : i32
    %15 = arith.maxsi %c0_i32_6, %14 : i32
    %16 = arith.minsi %c0_i32_7, %15 : i32
    %c0_i32_8 = arith.constant 0 : i32
    %c0_i32_9 = arith.constant 0 : i32
    %c0_i32_10 = arith.constant 0 : i32
    return %16, %c0_i32_8, %c0_i32_9 : i32, i32, i32
  }
  func.func @transform_3(%arg0: i32, %arg1: i32) -> (i32, i32, i32) {
    %c2_i32 = arith.constant 2 : i32
    %0 = arith.muli %arg1, %c2_i32 : i32
    %1 = arith.addi %0, %arg0 : i32
    %c1_i32 = arith.constant 1 : i32
    %2 = arith.addi %arg0, %c1_i32 : i32
    %c2_i32_0 = arith.constant 2 : i32
    %c0_i32 = arith.constant 0 : i32
    %3 = arith.cmpi eq, %c2_i32_0, %c0_i32 : i32
    %c1_i32_1 = arith.constant 1 : i32
    %4 = arith.select %3, %c1_i32_1, %c2_i32_0 : i32
    %5 = arith.remsi %2, %4 : i32
    %c0_i32_2 = arith.constant 0 : i32
    %6 = arith.cmpi ne, %5, %c0_i32_2 : i32
    %c0_i32_3 = arith.constant 0 : i32
    %7 = arith.cmpi slt, %5, %c0_i32_3 : i32
    %c0_i32_4 = arith.constant 0 : i32
    %8 = arith.cmpi slt, %4, %c0_i32_4 : i32
    %9 = arith.xori %7, %8 : i1
    %10 = arith.andi %9, %6 : i1
    %11 = arith.addi %5, %4 : i32
    %12 = arith.select %10, %11, %5 : i32
    %c1_i32_5 = arith.constant 1 : i32
    %13 = arith.subi %1, %c1_i32_5 : i32
    %14 = arith.maxsi %13, %12 : i32
    %c0_i32_6 = arith.constant 0 : i32
    %c0_i32_7 = arith.constant 0 : i32
    %15 = arith.maxsi %c0_i32_6, %14 : i32
    %16 = arith.minsi %c0_i32_7, %15 : i32
    %c0_i32_8 = arith.constant 0 : i32
    %c0_i32_9 = arith.constant 0 : i32
    %c0_i32_10 = arith.constant 0 : i32
    return %16, %c0_i32_8, %c0_i32_9 : i32, i32, i32
  }
  func.func @transform_4(%arg0: i32, %arg1: i32) -> (i32, i32) {
    %c0_i32 = arith.constant 0 : i32
    %c0_i32_0 = arith.constant 0 : i32
    return %arg0, %c0_i32 : i32, i32
  }
  func.func @transform_5(%arg0: i32, %arg1: i32) -> (i32, i32) {
    %c0_i32 = arith.constant 0 : i32
    %c0_i32_0 = arith.constant 0 : i32
    return %arg0, %c0_i32 : i32, i32
  }
}

</mosaic_0001>

<llo_original>
// kernel: loss_forward.1
$region0: #{loss_forward.1}
  #allocation0 [shape = 'u32[]', space=smem, size = 0x4, offset = 0x4, fixed_abs, tag = 'smem constant byte address 0x4 - core index']
  #allocation1 [shape = 'u32[144,128]{1,0:T(1,128)}', space=vmem, size = 0x12000, scoped, tag = 'internal scratch']
  #allocation2 [shape = 'f32[8,128]{1,0:T(8,128)}', space=vmem, size = 0x1000, scoped, tag = 'scratch operand']
  #allocation3 [shape = 'f32[8,128]{1,0:T(8,128)}', space=vmem, size = 0x1000, scoped, tag = 'scratch operand']
  %s0 = inlined_call_operand.vmem [shape: f32[2,8,128], index: 0, kind: input, shape index: {}]
  %s1 = inlined_call_operand.vmem [shape: f32[2,8,128], index: 1, kind: input, shape index: {}]
  %s2 = inlined_call_operand.vmem [shape: f32[1,8,128], index: 2, kind: input, shape index: {}]
  %s3 = inlined_call_operand.vmem [shape: f32[1,8,128], index: 3, kind: input, shape index: {}]
  %s4 = inlined_call_operand.vmem [shape: f32[16,128], index: 4, kind: output, shape index: {0}]
  %s5 = inlined_call_operand.vmem [shape: f32[16,128], index: 5, kind: output, shape index: {1}]
  %6 = xla_tuple %s4, %s5
  %s7 = sld [smem:[#allocation0]]
  $region73: #{loss_forward.1} parent=0
    _
  %s9 = ssub.s32 1, %s7
  %s10 = scalar_select 0, %s9, %s7
  loop: start=0, step=1, limit=4
  $region2: #{loss_forward.1} parent=0 // loop_pre_header
    _
  $region3: #{loss_forward.1} parent=0 // loop_header
    %s12 = sphi 0, %s16
    %p13 = scmp.ge.s32.totalorder %s12, 4
    %s19 = sphi 0, %s31
    %s20 = sphi 0, %s27
    %s21 = sphi 0, %s19
    %s22 = sphi 0, %s20
    %s23 = sphi 0, %s21
    %s24 = sphi 0, %s22
    %s76 = sphi 0, %s78
    %s79 = sphi 0, %s76
    %s80 = sphi 0, %s79
    %s96 = sphi 0, %s80
    %s144 = sphi 0, %s146
    %s147 = sphi 0, %s144
    %s148 = sphi 0, %s147
    %s164 = sphi 0, %s148
    %s214 = sphi 0, %s216
    %s217 = sphi 0, %s214
    %s218 = sphi 0, %s217
    %s234 = sphi 0, %s218
    %s284 = sphi 0, %s286
    %s287 = sphi 0, %s284
    %s288 = sphi 0, %s287
    %s304 = sphi 0, %s288
    %s310 = sphi 0, %s312
    %s313 = sphi 0, %s310
    %s314 = sphi 0, %s313
    %s330 = sphi 0, %s314
    %s336 = sphi 0, %s338
    %s339 = sphi 0, %s336
    %s340 = sphi 0, %s339
    %s356 = sphi 0, %s340
  $region4: #{loss_forward.1} parent=0 // loop_header_branch
    %15 = sbr.rel (%p13) target = $region8
  $region5: #{loss_forward.1} parent=0 // loop_body
    %s17 = ssub.s32 %s12, 1
    %s18 = ssub.s32 %s12, 2
    %s25 = sadd.s32 1, %s20
    %p26 = scmp.ge.s32.totalorder %s25, 1
    %s27 = scalar_select %p26, 0, %s25
    %s28 = sadd.s32 1, %s19
    %s29 = scalar_select %p26, %s28, %s19
    %p30 = scmp.ge.s32.totalorder %s29, 2
    %s31 = scalar_select %p30, 0, %s29
    %s32 = smul.u32 %s20, 2
    %s33 = sadd.s32 %s32, %s19
    %p34 = scmp.lt.s32.totalorder %s19, 0
    %s35 = ssub.s32 0, %s19
    %s36 = scalar_select %p34, %s35, %s19
    %s37 = sand.u32 %s36, 1
    %s38 = ssub.s32 0, %s37
    %s39 = scalar_select %p34, %s38, %s37
    %p40 = scmp.ne.s32.totalorder %s39, 0
    %p41 = scmp.lt.s32.totalorder %s39, 0
    %p42 = pnand %p41, %p40
    %p43 = pneg %p42
    %s44 = sadd.s32 %s39, 2
    %s45 = scalar_select %p43, %s44, %s39
    %s46 = ssub.s32 0, %s45
    %p47 = scmp.lt.s32.totalorder %s33, %s46
    %s48 = scalar_select %p47, %s33, %s46
    %p49 = scmp.gt.s32.totalorder %s48, 0
    %s50 = scalar_select %p49, %s48, 0
    %p51 = scmp.lt.s32.totalorder %s50, 0
    %s52 = scalar_select %p51, %s50, 0
    %s53 = smul.u32 %s27, 2
    %s54 = sadd.s32 %s53, %s31
    %p55 = scmp.lt.s32.totalorder %s31, 0
    %s56 = ssub.s32 0, %s31
    %s57 = scalar_select %p55, %s56, %s31
    %s58 = sand.u32 %s57, 1
    %s59 = ssub.s32 0, %s58
    %s60 = scalar_select %p55, %s59, %s58
    %p61 = scmp.ne.s32.totalorder %s60, 0
    %p62 = scmp.lt.s32.totalorder %s60, 0
    %p63 = pnand %p62, %p61
    %p64 = pneg %p63
    %s65 = sadd.s32 %s60, 2
    %s66 = scalar_select %p64, %s65, %s60
    %s67 = ssub.s32 0, %s66
    %p68 = scmp.lt.s32.totalorder %s54, %s67
    %s69 = scalar_select %p68, %s54, %s67
    %p70 = scmp.gt.s32.totalorder %s69, 0
    %s71 = scalar_select %p70, %s69, 0
    %p72 = scmp.lt.s32.totalorder %s71, 0
    %s73 = scalar_select %p72, %s71, 0
    %s74 = ssub.s32 %s52, %s73
    %p75 = scmp.eq.s32.totalorder %s74, 0
    %s77 = sadd.s32 %s76, 1
    %s78 = scalar_select %p75, %s76, %s77
    %p81 = pneg %p75
    %p82 = scmp.eq.s32.totalorder %s12, 1
    %p83 = por %p81, %p82
    %p84 = scmp.ne.s32.totalorder %s76, %s79
    %p85 = scmp.eq.s32.totalorder %s12, 0
    %p86 = por %p84, %p85
    %p87 = scmp.ne.s32.totalorder %s76, %s79
    %p88 = scmp.eq.s32.totalorder %s17, 1
    %p89 = por %p87, %p88
    %p90 = scmp.ne.s32.totalorder %s79, %s80
    %p91 = scmp.eq.s32.totalorder %s17, 0
    %p92 = por %p90, %p91
    %p93 = scmp.ne.s32.totalorder %s79, %s80
    %p94 = scmp.eq.s32.totalorder %s18, 1
    %p95 = por %p93, %p94
    %p97 = scmp.ne.s32.totalorder %s80, %s96
    %p98 = scmp.eq.s32.totalorder %s18, 0
    %p99 = por %p97, %p98
    %s100 = smul.u32 %s20, 2
    %s101 = sadd.s32 %s100, %s19
    %p102 = scmp.lt.s32.totalorder %s19, 0
    %s103 = ssub.s32 0, %s19
    %s104 = scalar_select %p102, %s103, %s19
    %s105 = sand.u32 %s104, 1
    %s106 = ssub.s32 0, %s105
    %s107 = scalar_select %p102, %s106, %s105
    %p108 = scmp.ne.s32.totalorder %s107, 0
    %p109 = scmp.lt.s32.totalorder %s107, 0
    %p110 = pnand %p109, %p108
    %p111 = pneg %p110
    %s112 = sadd.s32 %s107, 2
    %s113 = scalar_select %p111, %s112, %s107
    %s114 = ssub.s32 0, %s113
    %p115 = scmp.lt.s32.totalorder %s101, %s114
    %s116 = scalar_select %p115, %s101, %s114
    %p117 = scmp.gt.s32.totalorder %s116, 0
    %s118 = scalar_select %p117, %s116, 0
    %p119 = scmp.lt.s32.totalorder %s118, 0
    %s120 = scalar_select %p119, %s118, 0
    %s121 = smul.u32 %s27, 2
    %s122 = sadd.s32 %s121, %s31
    %p123 = scmp.lt.s32.totalorder %s31, 0
    %s124 = ssub.s32 0, %s31
    %s125 = scalar_select %p123, %s124, %s31
    %s126 = sand.u32 %s125, 1
    %s127 = ssub.s32 0, %s126
    %s128 = scalar_select %p123, %s127, %s126
    %p129 = scmp.ne.s32.totalorder %s128, 0
    %p130 = scmp.lt.s32.totalorder %s128, 0
    %p131 = pnand %p130, %p129
    %p132 = pneg %p131
    %s133 = sadd.s32 %s128, 2
    %s134 = scalar_select %p132, %s133, %s128
    %s135 = ssub.s32 0, %s134
    %p136 = scmp.lt.s32.totalorder %s122, %s135
    %s137 = scalar_select %p136, %s122, %s135
    %p138 = scmp.gt.s32.totalorder %s137, 0
    %s139 = scalar_select %p138, %s137, 0
    %p140 = scmp.lt.s32.totalorder %s139, 0
    %s141 = scalar_select %p140, %s139, 0
    %s142 = ssub.s32 %s120, %s141
    %p143 = scmp.eq.s32.totalorder %s142, 0
    %s145 = sadd.s32 %s144, 1
    %s146 = scalar_select %p143, %s144, %s145
    %p149 = pneg %p143
    %p150 = scmp.eq.s32.totalorder %s12, 1
    %p151 = por %p149, %p150
    %p152 = scmp.ne.s32.totalorder %s144, %s147
    %p153 = scmp.eq.s32.totalorder %s12, 0
    %p154 = por %p152, %p153
    %p155 = scmp.ne.s32.totalorder %s144, %s147
    %p156 = scmp.eq.s32.totalorder %s17, 1
    %p157 = por %p155, %p156
    %p158 = scmp.ne.s32.totalorder %s147, %s148
    %p159 = scmp.eq.s32.totalorder %s17, 0
    %p160 = por %p158, %p159
    %p161 = scmp.ne.s32.totalorder %s147, %s148
    %p162 = scmp.eq.s32.totalorder %s18, 1
    %p163 = por %p161, %p162
    %p165 = scmp.ne.s32.totalorder %s148, %s164
    %p166 = scmp.eq.s32.totalorder %s18, 0
    %p167 = por %p165, %p166
    %s168 = smul.u32 %s20, 2
    %s169 = sadd.s32 %s168, %s19
    %s170 = sadd.s32 %s19, 1
    %p171 = scmp.lt.s32.totalorder %s170, 0
    %s172 = ssub.s32 0, %s170
    %s173 = scalar_select %p171, %s172, %s170
    %s174 = sand.u32 %s173, 1
    %s175 = ssub.s32 0, %s174
    %s176 = scalar_select %p171, %s175, %s174
    %p177 = scmp.ne.s32.totalorder %s176, 0
    %p178 = scmp.lt.s32.totalorder %s176, 0
    %p179 = pnand %p178, %p177
    %p180 = pneg %p179
    %s181 = sadd.s32 %s176, 2
    %s182 = scalar_select %p180, %s181, %s176
    %s183 = ssub.s32 %s169, 1
    %p184 = scmp.gt.s32.totalorder %s183, %s182
    %s185 = scalar_select %p184, %s183, %s182
    %p186 = scmp.gt.s32.totalorder %s185, 0
    %s187 = scalar_select %p186, %s185, 0
    %p188 = scmp.lt.s32.totalorder %s187, 0
    %s189 = scalar_select %p188, %s187, 0
    %s190 = smul.u32 %s27, 2
    %s191 = sadd.s32 %s190, %s31
    %s192 = sadd.s32 %s31, 1
    %p193 = scmp.lt.s32.totalorder %s192, 0
    %s194 = ssub.s32 0, %s192
    %s195 = scalar_select %p193, %s194, %s192
    %s196 = sand.u32 %s195, 1
    %s197 = ssub.s32 0, %s196
    %s198 = scalar_select %p193, %s197, %s196
    %p199 = scmp.ne.s32.totalorder %s198, 0
    %p200 = scmp.lt.s32.totalorder %s198, 0
    %p201 = pnand %p200, %p199
    %p202 = pneg %p201
    %s203 = sadd.s32 %s198, 2
    %s204 = scalar_select %p202, %s203, %s198
    %s205 = ssub.s32 %s191, 1
    %p206 = scmp.gt.s32.totalorder %s205, %s204
    %s207 = scalar_select %p206, %s205, %s204
    %p208 = scmp.gt.s32.totalorder %s207, 0
    %s209 = scalar_select %p208, %s207, 0
    %p210 = scmp.lt.s32.totalorder %s209, 0
    %s211 = scalar_select %p210, %s209, 0
    %s212 = ssub.s32 %s189, %s211
    %p213 = scmp.eq.s32.totalorder %s212, 0
    %s215 = sadd.s32 %s214, 1
    %s216 = scalar_select %p213, %s214, %s215
    %p219 = pneg %p213
    %p220 = scmp.eq.s32.totalorder %s12, 1
    %p221 = por %p219, %p220
    %p222 = scmp.ne.s32.totalorder %s214, %s217
    %p223 = scmp.eq.s32.totalorder %s12, 0
    %p224 = por %p222, %p223
    %p225 = scmp.ne.s32.totalorder %s214, %s217
    %p226 = scmp.eq.s32.totalorder %s17, 1
    %p227 = por %p225, %p226
    %p228 = scmp.ne.s32.totalorder %s217, %s218
    %p229 = scmp.eq.s32.totalorder %s17, 0
    %p230 = por %p228, %p229
    %p231 = scmp.ne.s32.totalorder %s217, %s218
    %p232 = scmp.eq.s32.totalorder %s18, 1
    %p233 = por %p231, %p232
    %p235 = scmp.ne.s32.totalorder %s218, %s234
    %p236 = scmp.eq.s32.totalorder %s18, 0
    %p237 = por %p235, %p236
    %s238 = smul.u32 %s20, 2
    %s239 = sadd.s32 %s238, %s19
    %s240 = sadd.s32 %s19, 1
    %p241 = scmp.lt.s32.totalorder %s240, 0
    %s242 = ssub.s32 0, %s240
    %s243 = scalar_select %p241, %s242, %s240
    %s244 = sand.u32 %s243, 1
    %s245 = ssub.s32 0, %s244
    %s246 = scalar_select %p241, %s245, %s244
    %p247 = scmp.ne.s32.totalorder %s246, 0
    %p248 = scmp.lt.s32.totalorder %s246, 0
    %p249 = pnand %p248, %p247
    %p250 = pneg %p249
    %s251 = sadd.s32 %s246, 2
    %s252 = scalar_select %p250, %s251, %s246
    %s253 = ssub.s32 %s239, 1
    %p254 = scmp.gt.s32.totalorder %s253, %s252
    %s255 = scalar_select %p254, %s253, %s252
    %p256 = scmp.gt.s32.totalorder %s255, 0
    %s257 = scalar_select %p256, %s255, 0
    %p258 = scmp.lt.s32.totalorder %s257, 0
    %s259 = scalar_select %p258, %s257, 0
    %s260 = smul.u32 %s27, 2
    %s261 = sadd.s32 %s260, %s31
    %s262 = sadd.s32 %s31, 1
    %p263 = scmp.lt.s32.totalorder %s262, 0
    %s264 = ssub.s32 0, %s262
    %s265 = scalar_select %p263, %s264, %s262
    %s266 = sand.u32 %s265, 1
    %s267 = ssub.s32 0, %s266
    %s268 = scalar_select %p263, %s267, %s266
    %p269 = scmp.ne.s32.totalorder %s268, 0
    %p270 = scmp.lt.s32.totalorder %s268, 0
    %p271 = pnand %p270, %p269
    %p272 = pneg %p271
    %s273 = sadd.s32 %s268, 2
    %s274 = scalar_select %p272, %s273, %s268
    %s275 = ssub.s32 %s261, 1
    %p276 = scmp.gt.s32.totalorder %s275, %s274
    %s277 = scalar_select %p276, %s275, %s274
    %p278 = scmp.gt.s32.totalorder %s277, 0
    %s279 = scalar_select %p278, %s277, 0
    %p280 = scmp.lt.s32.totalorder %s279, 0
    %s281 = scalar_select %p280, %s279, 0
    %s282 = ssub.s32 %s259, %s281
    %p283 = scmp.eq.s32.totalorder %s282, 0
    %s285 = sadd.s32 %s284, 1
    %s286 = scalar_select %p283, %s284, %s285
    %p289 = pneg %p283
    %p290 = scmp.eq.s32.totalorder %s12, 1
    %p291 = por %p289, %p290
    %p292 = scmp.ne.s32.totalorder %s284, %s287
    %p293 = scmp.eq.s32.totalorder %s12, 0
    %p294 = por %p292, %p293
    %p295 = scmp.ne.s32.totalorder %s284, %s287
    %p296 = scmp.eq.s32.totalorder %s17, 1
    %p297 = por %p295, %p296
    %p298 = scmp.ne.s32.totalorder %s287, %s288
    %p299 = scmp.eq.s32.totalorder %s17, 0
    %p300 = por %p298, %p299
    %p301 = scmp.ne.s32.totalorder %s287, %s288
    %p302 = scmp.eq.s32.totalorder %s18, 1
    %p303 = por %p301, %p302
    %p305 = scmp.ne.s32.totalorder %s288, %s304
    %p306 = scmp.eq.s32.totalorder %s18, 0
    %p307 = por %p305, %p306
    %s308 = ssub.s32 %s19, %s31
    %p309 = scmp.eq.s32.totalorder %s308, 0
    %s311 = sadd.s32 %s310, 1
    %s312 = scalar_select %p309, %s310, %s311
    %p315 = pneg %p309
    %p316 = scmp.eq.s32.totalorder %s12, 1
    %p317 = por %p315, %p316
    %p318 = scmp.ne.s32.totalorder %s310, %s313
    %p319 = scmp.eq.s32.totalorder %s12, 0
    %p320 = por %p318, %p319
    %p321 = scmp.ne.s32.totalorder %s310, %s313
    %p322 = scmp.eq.s32.totalorder %s17, 1
    %p323 = por %p321, %p322
    %p324 = scmp.ne.s32.totalorder %s313, %s314
    %p325 = scmp.eq.s32.totalorder %s17, 0
    %p326 = por %p324, %p325
    %p327 = scmp.ne.s32.totalorder %s313, %s314
    %p328 = scmp.eq.s32.totalorder %s18, 1
    %p329 = por %p327, %p328
    %p331 = scmp.ne.s32.totalorder %s314, %s330
    %p332 = scmp.eq.s32.totalorder %s18, 0
    %p333 = por %p331, %p332
    %s334 = ssub.s32 %s19, %s31
    %p335 = scmp.eq.s32.totalorder %s334, 0
    %s337 = sadd.s32 %s336, 1
    %s338 = scalar_select %p335, %s336, %s337
    %p341 = pneg %p335
    %p342 = scmp.eq.s32.totalorder %s12, 1
    %p343 = por %p341, %p342
    %p344 = scmp.ne.s32.totalorder %s336, %s339
    %p345 = scmp.eq.s32.totalorder %s12, 0
    %p346 = por %p344, %p345
    %p347 = scmp.ne.s32.totalorder %s336, %s339
    %p348 = scmp.eq.s32.totalorder %s17, 1
    %p349 = por %p347, %p348
    %p350 = scmp.ne.s32.totalorder %s339, %s340
    %p351 = scmp.eq.s32.totalorder %s17, 0
    %p352 = por %p350, %p351
    %p353 = scmp.ne.s32.totalorder %s339, %s340
    %p354 = scmp.eq.s32.totalorder %s18, 1
    %p355 = por %p353, %p354
    %p357 = scmp.ne.s32.totalorder %s340, %s356
    %p358 = scmp.eq.s32.totalorder %s18, 0
    %p359 = por %p357, %p358
    %p360 = scmp.le.s32.totalorder 1, %s12
    %p361 = scmp.lt.s32.totalorder %s12, 3
    %p362 = pnand %p360, %p361
    %p363 = pneg %p362
    // Predicated region
    $region9: #{loss_forward.1} parent=5 // pred_check
      _
    $region10: #{loss_forward.1} parent=5 // pred_check_branch
      %365 = sbr.rel (%p362) target = $region12
    $region11: #{loss_forward.1} parent=5 // pred_region
      %s366 = ssub.s32 %s12, 1
    $region12: #{loss_forward.1} parent=5 // pred_fallthru
      _
    %p367 = scmp.lt.s32.totalorder %s12, 2
    // Predicated region
    $region13: #{loss_forward.1} parent=5 // pred_check
      %p368 = pneg %p367
    $region14: #{loss_forward.1} parent=5 // pred_check_branch
      %370 = sbr.rel (%p368) target = $region16
    $region15: #{loss_forward.1} parent=5 // pred_region
      // Predicated region
      $region17: #{loss_forward.1} parent=15 // pred_check
        %p371 = pneg %p86
      $region18: #{loss_forward.1} parent=15 // pred_check_branch
        %373 = sbr.rel (%p371) target = $region20
      $region19: #{loss_forward.1} parent=15 // pred_region
        %s374 = smul.u32 %s20, 2
        %s375 = sadd.s32 %s374, %s19
        %p376 = scmp.lt.s32.totalorder %s19, 0
        %s377 = ssub.s32 0, %s19
        %s378 = scalar_select %p376, %s377, %s19
        %s379 = sand.u32 %s378, 1
        %s380 = ssub.s32 0, %s379
        %s381 = scalar_select %p376, %s380, %s379
        %p382 = scmp.ne.s32.totalorder %s381, 0
        %p383 = scmp.lt.s32.totalorder %s381, 0
        %p384 = pnand %p383, %p382
        %p385 = pneg %p384
        %s386 = sadd.s32 %s381, 2
        %s387 = scalar_select %p385, %s386, %s381
        %s388 = ssub.s32 0, %s387
        %p389 = scmp.lt.s32.totalorder %s375, %s388
        %s390 = scalar_select %p389, %s375, %s388
        %p391 = scmp.gt.s32.totalorder %s390, 0
        %s392 = scalar_select %p391, %s390, 0
        %p393 = scmp.lt.s32.totalorder %s392, 0
        %s394 = scalar_select %p393, %s392, 0
        %s395 = smul.u32 2, %s394
        %p396 = scmp.lt.s32.totalorder %s395, 1
        %s397 = scalar_select %p396, %s395, 1
        %s398 = smul.addr %s397, 8
        %s399 = scalar_lea.vmem %s0, %s398
        %s400 = smul.u32 %s20, 2
        %s401 = sadd.s32 %s400, %s19
        %p402 = scmp.lt.s32.totalorder %s19, 0
        %s403 = ssub.s32 0, %s19
        %s404 = scalar_select %p402, %s403, %s19
        %s405 = sand.u32 %s404, 1
        %s406 = ssub.s32 0, %s405
        %s407 = scalar_select %p402, %s406, %s405
        %p408 = scmp.ne.s32.totalorder %s407, 0
        %p409 = scmp.lt.s32.totalorder %s407, 0
        %p410 = pnand %p409, %p408
        %p411 = pneg %p410
        %s412 = sadd.s32 %s407, 2
        %s413 = scalar_select %p411, %s412, %s407
        %s414 = ssub.s32 0, %s413
        %p415 = scmp.lt.s32.totalorder %s401, %s414
        %s416 = scalar_select %p415, %s401, %s414
        %p417 = scmp.gt.s32.totalorder %s416, 0
        %s418 = scalar_select %p417, %s416, 0
        %p419 = scmp.lt.s32.totalorder %s418, 0
        %s420 = scalar_select %p419, %s418, 0
        %s421 = smul.u32 2, %s420
      $region20: #{loss_forward.1} parent=15 // pred_fallthru
        _
      // Predicated region
      $region21: #{loss_forward.1} parent=15 // pred_check
        %p422 = pneg %p154
      $region22: #{loss_forward.1} parent=15 // pred_check_branch
        %424 = sbr.rel (%p422) target = $region24
      $region23: #{loss_forward.1} parent=15 // pred_region
        %s425 = smul.u32 %s20, 2
        %s426 = sadd.s32 %s425, %s19
        %p427 = scmp.lt.s32.totalorder %s19, 0
        %s428 = ssub.s32 0, %s19
        %s429 = scalar_select %p427, %s428, %s19
        %s430 = sand.u32 %s429, 1
        %s431 = ssub.s32 0, %s430
        %s432 = scalar_select %p427, %s431, %s430
        %p433 = scmp.ne.s32.totalorder %s432, 0
        %p434 = scmp.lt.s32.totalorder %s432, 0
        %p435 = pnand %p434, %p433
        %p436 = pneg %p435
        %s437 = sadd.s32 %s432, 2
        %s438 = scalar_select %p436, %s437, %s432
        %s439 = ssub.s32 0, %s438
        %p440 = scmp.lt.s32.totalorder %s426, %s439
        %s441 = scalar_select %p440, %s426, %s439
        %p442 = scmp.gt.s32.totalorder %s441, 0
        %s443 = scalar_select %p442, %s441, 0
        %p444 = scmp.lt.s32.totalorder %s443, 0
        %s445 = scalar_select %p444, %s443, 0
        %s446 = smul.u32 2, %s445
        %p447 = scmp.lt.s32.totalorder %s446, 1
        %s448 = scalar_select %p447, %s446, 1
        %s449 = smul.addr %s448, 8
        %s450 = scalar_lea.vmem %s1, %s449
        %s451 = smul.u32 %s20, 2
        %s452 = sadd.s32 %s451, %s19
        %p453 = scmp.lt.s32.totalorder %s19, 0
        %s454 = ssub.s32 0, %s19
        %s455 = scalar_select %p453, %s454, %s19
        %s456 = sand.u32 %s455, 1
        %s457 = ssub.s32 0, %s456
        %s458 = scalar_select %p453, %s457, %s456
        %p459 = scmp.ne.s32.totalorder %s458, 0
        %p460 = scmp.lt.s32.totalorder %s458, 0
        %p461 = pnand %p460, %p459
        %p462 = pneg %p461
        %s463 = sadd.s32 %s458, 2
        %s464 = scalar_select %p462, %s463, %s458
        %s465 = ssub.s32 0, %s464
        %p466 = scmp.lt.s32.totalorder %s452, %s465
        %s467 = scalar_select %p466, %s452, %s465
        %p468 = scmp.gt.s32.totalorder %s467, 0
        %s469 = scalar_select %p468, %s467, 0
        %p470 = scmp.lt.s32.totalorder %s469, 0
        %s471 = scalar_select %p470, %s469, 0
        %s472 = smul.u32 2, %s471
      $region24: #{loss_forward.1} parent=15 // pred_fallthru
        _
      // Predicated region
      $region25: #{loss_forward.1} parent=15 // pred_check
        %p473 = pneg %p224
      $region26: #{loss_forward.1} parent=15 // pred_check_branch
        %475 = sbr.rel (%p473) target = $region28
      $region27: #{loss_forward.1} parent=15 // pred_region
        %s476 = smul.u32 %s20, 2
        %s477 = sadd.s32 %s476, %s19
        %s478 = sadd.s32 %s19, 1
        %p479 = scmp.lt.s32.totalorder %s478, 0
        %s480 = ssub.s32 0, %s478
        %s481 = scalar_select %p479, %s480, %s478
        %s482 = sand.u32 %s481, 1
        %s483 = ssub.s32 0, %s482
        %s484 = scalar_select %p479, %s483, %s482
        %p485 = scmp.ne.s32.totalorder %s484, 0
        %p486 = scmp.lt.s32.totalorder %s484, 0
        %p487 = pnand %p486, %p485
        %p488 = pneg %p487
        %s489 = sadd.s32 %s484, 2
        %s490 = scalar_select %p488, %s489, %s484
        %s491 = ssub.s32 %s477, 1
        %p492 = scmp.gt.s32.totalorder %s491, %s490
        %s493 = scalar_select %p492, %s491, %s490
        %p494 = scmp.gt.s32.totalorder %s493, 0
        %s495 = scalar_select %p494, %s493, 0
        %p496 = scmp.lt.s32.totalorder %s495, 0
        %s497 = scalar_select %p496, %s495, 0
        %p498 = scmp.lt.s32.totalorder %s497, 0
        %s499 = scalar_select %p498, %s497, 0
        %s500 = smul.addr %s499, 8
        %s501 = scalar_lea.vmem %s2, %s500
        %s502 = smul.u32 %s20, 2
        %s503 = sadd.s32 %s502, %s19
        %s504 = sadd.s32 %s19, 1
        %p505 = scmp.lt.s32.totalorder %s504, 0
        %s506 = ssub.s32 0, %s504
        %s507 = scalar_select %p505, %s506, %s504
        %s508 = sand.u32 %s507, 1
        %s509 = ssub.s32 0, %s508
        %s510 = scalar_select %p505, %s509, %s508
        %p511 = scmp.ne.s32.totalorder %s510, 0
        %p512 = scmp.lt.s32.totalorder %s510, 0
        %p513 = pnand %p512, %p511
        %p514 = pneg %p513
        %s515 = sadd.s32 %s510, 2
        %s516 = scalar_select %p514, %s515, %s510
        %s517 = ssub.s32 %s503, 1
        %p518 = scmp.gt.s32.totalorder %s517, %s516
        %s519 = scalar_select %p518, %s517, %s516
        %p520 = scmp.gt.s32.totalorder %s519, 0
        %s521 = scalar_select %p520, %s519, 0
        %p522 = scmp.lt.s32.totalorder %s521, 0
        %s523 = scalar_select %p522, %s521, 0
      $region28: #{loss_forward.1} parent=15 // pred_fallthru
        _
      // Predicated region
      $region29: #{loss_forward.1} parent=15 // pred_check
        %p524 = pneg %p294
      $region30: #{loss_forward.1} parent=15 // pred_check_branch
        %526 = sbr.rel (%p524) target = $region32
      $region31: #{loss_forward.1} parent=15 // pred_region
        %s527 = smul.u32 %s20, 2
        %s528 = sadd.s32 %s527, %s19
        %s529 = sadd.s32 %s19, 1
        %p530 = scmp.lt.s32.totalorder %s529, 0
        %s531 = ssub.s32 0, %s529
        %s532 = scalar_select %p530, %s531, %s529
        %s533 = sand.u32 %s532, 1
        %s534 = ssub.s32 0, %s533
        %s535 = scalar_select %p530, %s534, %s533
        %p536 = scmp.ne.s32.totalorder %s535, 0
        %p537 = scmp.lt.s32.totalorder %s535, 0
        %p538 = pnand %p537, %p536
        %p539 = pneg %p538
        %s540 = sadd.s32 %s535, 2
        %s541 = scalar_select %p539, %s540, %s535
        %s542 = ssub.s32 %s528, 1
        %p543 = scmp.gt.s32.totalorder %s542, %s541
        %s544 = scalar_select %p543, %s542, %s541
        %p545 = scmp.gt.s32.totalorder %s544, 0
        %s546 = scalar_select %p545, %s544, 0
        %p547 = scmp.lt.s32.totalorder %s546, 0
        %s548 = scalar_select %p547, %s546, 0
        %p549 = scmp.lt.s32.totalorder %s548, 0
        %s550 = scalar_select %p549, %s548, 0
        %s551 = smul.addr %s550, 8
        %s552 = scalar_lea.vmem %s3, %s551
        %s553 = smul.u32 %s20, 2
        %s554 = sadd.s32 %s553, %s19
        %s555 = sadd.s32 %s19, 1
        %p556 = scmp.lt.s32.totalorder %s555, 0
        %s557 = ssub.s32 0, %s555
        %s558 = scalar_select %p556, %s557, %s555
        %s559 = sand.u32 %s558, 1
        %s560 = ssub.s32 0, %s559
        %s561 = scalar_select %p556, %s560, %s559
        %p562 = scmp.ne.s32.totalorder %s561, 0
        %p563 = scmp.lt.s32.totalorder %s561, 0
        %p564 = pnand %p563, %p562
        %p565 = pneg %p564
        %s566 = sadd.s32 %s561, 2
        %s567 = scalar_select %p565, %s566, %s561
        %s568 = ssub.s32 %s554, 1
        %p569 = scmp.gt.s32.totalorder %s568, %s567
        %s570 = scalar_select %p569, %s568, %s567
        %p571 = scmp.gt.s32.totalorder %s570, 0
        %s572 = scalar_select %p571, %s570, 0
        %p573 = scmp.lt.s32.totalorder %s572, 0
        %s574 = scalar_select %p573, %s572, 0
      $region32: #{loss_forward.1} parent=15 // pred_fallthru
        _
    $region16: #{loss_forward.1} parent=5 // pred_fallthru
      _
    %p575 = scmp.le.s32.totalorder 1, %s12
    %p576 = scmp.lt.s32.totalorder %s12, 3
    %p577 = pnand %p575, %p576
    %p578 = pneg %p577
    // Predicated region
    $region33: #{loss_forward.1} parent=5 // pred_check
      _
    $region34: #{loss_forward.1} parent=5 // pred_check_branch
      %580 = sbr.rel (%p577) target = $region36
    $region35: #{loss_forward.1} parent=5 // pred_region
      %s581 = ssub.s32 %s12, 1
      %s582 = smul.u32 %s22, 2
      %s583 = sadd.s32 %s582, %s21
      %p584 = scmp.lt.s32.totalorder %s21, 0
      %s585 = ssub.s32 0, %s21
      %s586 = scalar_select %p584, %s585, %s21
      %s587 = sand.u32 %s586, 1
      %s588 = ssub.s32 0, %s587
      %s589 = scalar_select %p584, %s588, %s587
      %p590 = scmp.ne.s32.totalorder %s589, 0
      %p591 = scmp.lt.s32.totalorder %s589, 0
      %p592 = pnand %p591, %p590
      %p593 = pneg %p592
      %s594 = sadd.s32 %s589, 2
      %s595 = scalar_select %p593, %s594, %s589
      %s596 = ssub.s32 0, %s595
      %p597 = scmp.lt.s32.totalorder %s583, %s596
      %s598 = scalar_select %p597, %s583, %s596
      %p599 = scmp.gt.s32.totalorder %s598, 0
      %s600 = scalar_select %p599, %s598, 0
      %p601 = scmp.lt.s32.totalorder %s600, 0
      %s602 = scalar_select %p601, %s600, 0
      %s603 = smul.u32 2, %s602
      %p604 = scmp.lt.s32.totalorder %s603, 1
      %s605 = scalar_select %p604, %s603, 1
      %s606 = smul.addr %s605, 8
      %s607 = scalar_lea.vmem %s0, %s606
      %p608 = pneg %p92
      %p609 = pneg %p89
      %s610 = smul.u32 %s22, 2
      %s611 = sadd.s32 %s610, %s21
      %p612 = scmp.lt.s32.totalorder %s21, 0
      %s613 = ssub.s32 0, %s21
      %s614 = scalar_select %p612, %s613, %s21
      %s615 = sand.u32 %s614, 1
      %s616 = ssub.s32 0, %s615
      %s617 = scalar_select %p612, %s616, %s615
      %p618 = scmp.ne.s32.totalorder %s617, 0
      %p619 = scmp.lt.s32.totalorder %s617, 0
      %p620 = pnand %p619, %p618
      %p621 = pneg %p620
      %s622 = sadd.s32 %s617, 2
      %s623 = scalar_select %p621, %s622, %s617
      %s624 = ssub.s32 0, %s623
      %p625 = scmp.lt.s32.totalorder %s611, %s624
      %s626 = scalar_select %p625, %s611, %s624
      %p627 = scmp.gt.s32.totalorder %s626, 0
      %s628 = scalar_select %p627, %s626, 0
      %p629 = scmp.lt.s32.totalorder %s628, 0
      %s630 = scalar_select %p629, %s628, 0
      %s631 = smul.u32 2, %s630
      %p632 = scmp.lt.s32.totalorder %s631, 1
      %s633 = scalar_select %p632, %s631, 1
      %s634 = smul.addr %s633, 8
      %s635 = scalar_lea.vmem %s1, %s634
      %p636 = pneg %p160
      %p637 = pneg %p157
      %s638 = smul.u32 %s22, 2
      %s639 = sadd.s32 %s638, %s21
      %s640 = sadd.s32 %s21, 1
      %p641 = scmp.lt.s32.totalorder %s640, 0
      %s642 = ssub.s32 0, %s640
      %s643 = scalar_select %p641, %s642, %s640
      %s644 = sand.u32 %s643, 1
      %s645 = ssub.s32 0, %s644
      %s646 = scalar_select %p641, %s645, %s644
      %p647 = scmp.ne.s32.totalorder %s646, 0
      %p648 = scmp.lt.s32.totalorder %s646, 0
      %p649 = pnand %p648, %p647
      %p650 = pneg %p649
      %s651 = sadd.s32 %s646, 2
      %s652 = scalar_select %p650, %s651, %s646
      %s653 = ssub.s32 %s639, 1
      %p654 = scmp.gt.s32.totalorder %s653, %s652
      %s655 = scalar_select %p654, %s653, %s652
      %p656 = scmp.gt.s32.totalorder %s655, 0
      %s657 = scalar_select %p656, %s655, 0
      %p658 = scmp.lt.s32.totalorder %s657, 0
      %s659 = scalar_select %p658, %s657, 0
      %p660 = scmp.lt.s32.totalorder %s659, 0
      %s661 = scalar_select %p660, %s659, 0
      %s662 = smul.addr %s661, 8
      %s663 = scalar_lea.vmem %s2, %s662
      %p664 = pneg %p230
      %p665 = pneg %p227
      %s666 = smul.u32 %s22, 2
      %s667 = sadd.s32 %s666, %s21
      %s668 = sadd.s32 %s21, 1
      %p669 = scmp.lt.s32.totalorder %s668, 0
      %s670 = ssub.s32 0, %s668
      %s671 = scalar_select %p669, %s670, %s668
      %s672 = sand.u32 %s671, 1
      %s673 = ssub.s32 0, %s672
      %s674 = scalar_select %p669, %s673, %s672
      %p675 = scmp.ne.s32.totalorder %s674, 0
      %p676 = scmp.lt.s32.totalorder %s674, 0
      %p677 = pnand %p676, %p675
      %p678 = pneg %p677
      %s679 = sadd.s32 %s674, 2
      %s680 = scalar_select %p678, %s679, %s674
      %s681 = ssub.s32 %s667, 1
      %p682 = scmp.gt.s32.totalorder %s681, %s680
      %s683 = scalar_select %p682, %s681, %s680
      %p684 = scmp.gt.s32.totalorder %s683, 0
      %s685 = scalar_select %p684, %s683, 0
      %p686 = scmp.lt.s32.totalorder %s685, 0
      %s687 = scalar_select %p686, %s685, 0
      %p688 = scmp.lt.s32.totalorder %s687, 0
      %s689 = scalar_select %p688, %s687, 0
      %s690 = smul.addr %s689, 8
      %s691 = scalar_lea.vmem %s3, %s690
      %p692 = pneg %p300
      %p693 = pneg %p297
      %p694 = pneg %p326
      %p695 = pneg %p323
      %p696 = scmp.lt.s32.totalorder %s21, 1
      %s697 = scalar_select %p696, %s21, 1
      %s698 = smul.addr %s697, 8
      %s699 = scalar_lea.vmem %s4, %s698
      %p700 = pneg %p352
      %p701 = pneg %p349
      %p702 = scmp.lt.s32.totalorder %s21, 1
      %s703 = scalar_select %p702, %s21, 1
      %s704 = smul.addr %s703, 8
      %s705 = scalar_lea.vmem %s5, %s704
      %s706 = smul.u32 %s22, 2
      %s707 = sadd.s32 %s706, %s21
      %p708 = scmp.lt.s32.totalorder %s21, 0
      %s709 = ssub.s32 0, %s21
      %s710 = scalar_select %p708, %s709, %s21
      %s711 = sand.u32 %s710, 1
      %s712 = ssub.s32 0, %s711
      %s713 = scalar_select %p708, %s712, %s711
      %p714 = scmp.ne.s32.totalorder %s713, 0
      %p715 = scmp.lt.s32.totalorder %s713, 0
      %p716 = pnand %p715, %p714
      %p717 = pneg %p716
      %s718 = sadd.s32 %s713, 2
      %s719 = scalar_select %p717, %s718, %s713
      %s720 = ssub.s32 0, %s719
      %p721 = scmp.lt.s32.totalorder %s707, %s720
      %s722 = scalar_select %p721, %s707, %s720
      %p723 = scmp.gt.s32.totalorder %s722, 0
      %s724 = scalar_select %p723, %s722, 0
      %p725 = scmp.lt.s32.totalorder %s724, 0
      %s726 = scalar_select %p725, %s724, 0
      %s727 = smul.u32 2, %s726
      %p728 = scmp.lt.s32.totalorder %s727, 1
      %s729 = scalar_select %p728, %s727, 1
      %s730 = smul.addr %s729, 8
      %s731 = scalar_lea.vmem %s0, %s730
      %s732 = smul.u32 %s22, 2
      %s733 = sadd.s32 %s732, %s21
      %p734 = scmp.lt.s32.totalorder %s21, 0
      %s735 = ssub.s32 0, %s21
      %s736 = scalar_select %p734, %s735, %s21
      %s737 = sand.u32 %s736, 1
      %s738 = ssub.s32 0, %s737
      %s739 = scalar_select %p734, %s738, %s737
      %p740 = scmp.ne.s32.totalorder %s739, 0
      %p741 = scmp.lt.s32.totalorder %s739, 0
      %p742 = pnand %p741, %p740
      %p743 = pneg %p742
      %s744 = sadd.s32 %s739, 2
      %s745 = scalar_select %p743, %s744, %s739
      %s746 = ssub.s32 0, %s745
      %p747 = scmp.lt.s32.totalorder %s733, %s746
      %s748 = scalar_select %p747, %s733, %s746
      %p749 = scmp.gt.s32.totalorder %s748, 0
      %s750 = scalar_select %p749, %s748, 0
      %p751 = scmp.lt.s32.totalorder %s750, 0
      %s752 = scalar_select %p751, %s750, 0
      %s753 = smul.u32 2, %s752
      %s754 = smul.u32 %s22, 2
      %s755 = sadd.s32 %s754, %s21
      %p756 = scmp.lt.s32.totalorder %s21, 0
      %s757 = ssub.s32 0, %s21
      %s758 = scalar_select %p756, %s757, %s21
      %s759 = sand.u32 %s758, 1
      %s760 = ssub.s32 0, %s759
      %s761 = scalar_select %p756, %s760, %s759
      %p762 = scmp.ne.s32.totalorder %s761, 0
      %p763 = scmp.lt.s32.totalorder %s761, 0
      %p764 = pnand %p763, %p762
      %p765 = pneg %p764
      %s766 = sadd.s32 %s761, 2
      %s767 = scalar_select %p765, %s766, %s761
      %s768 = ssub.s32 0, %s767
      %p769 = scmp.lt.s32.totalorder %s755, %s768
      %s770 = scalar_select %p769, %s755, %s768
      %p771 = scmp.gt.s32.totalorder %s770, 0
      %s772 = scalar_select %p771, %s770, 0
      %p773 = scmp.lt.s32.totalorder %s772, 0
      %s774 = scalar_select %p773, %s772, 0
      %s775 = smul.u32 2, %s774
      %p776 = scmp.lt.s32.totalorder %s775, 1
      %s777 = scalar_select %p776, %s775, 1
      %s778 = smul.addr %s777, 8
      %s779 = scalar_lea.vmem %s1, %s778
      %s780 = smul.u32 %s22, 2
      %s781 = sadd.s32 %s780, %s21
      %p782 = scmp.lt.s32.totalorder %s21, 0
      %s783 = ssub.s32 0, %s21
      %s784 = scalar_select %p782, %s783, %s21
      %s785 = sand.u32 %s784, 1
      %s786 = ssub.s32 0, %s785
      %s787 = scalar_select %p782, %s786, %s785
      %p788 = scmp.ne.s32.totalorder %s787, 0
      %p789 = scmp.lt.s32.totalorder %s787, 0
      %p790 = pnand %p789, %p788
      %p791 = pneg %p790
      %s792 = sadd.s32 %s787, 2
      %s793 = scalar_select %p791, %s792, %s787
      %s794 = ssub.s32 0, %s793
      %p795 = scmp.lt.s32.totalorder %s781, %s794
      %s796 = scalar_select %p795, %s781, %s794
      %p797 = scmp.gt.s32.totalorder %s796, 0
      %s798 = scalar_select %p797, %s796, 0
      %p799 = scmp.lt.s32.totalorder %s798, 0
      %s800 = scalar_select %p799, %s798, 0
      %s801 = smul.u32 2, %s800
      %s802 = smul.u32 %s22, 2
      %s803 = sadd.s32 %s802, %s21
      %s804 = sadd.s32 %s21, 1
      %p805 = scmp.lt.s32.totalorder %s804, 0
      %s806 = ssub.s32 0, %s804
      %s807 = scalar_select %p805, %s806, %s804
      %s808 = sand.u32 %s807, 1
      %s809 = ssub.s32 0, %s808
      %s810 = scalar_select %p805, %s809, %s808
      %p811 = scmp.ne.s32.totalorder %s810, 0
      %p812 = scmp.lt.s32.totalorder %s810, 0
      %p813 = pnand %p812, %p811
      %p814 = pneg %p813
      %s815 = sadd.s32 %s810, 2
      %s816 = scalar_select %p814, %s815, %s810
      %s817 = ssub.s32 %s803, 1
      %p818 = scmp.gt.s32.totalorder %s817, %s816
      %s819 = scalar_select %p818, %s817, %s816
      %p820 = scmp.gt.s32.totalorder %s819, 0
      %s821 = scalar_select %p820, %s819, 0
      %p822 = scmp.lt.s32.totalorder %s821, 0
      %s823 = scalar_select %p822, %s821, 0
      %p824 = scmp.lt.s32.totalorder %s823, 0
      %s825 = scalar_select %p824, %s823, 0
      %s826 = smul.addr %s825, 8
      %s827 = scalar_lea.vmem %s2, %s826
      %s828 = smul.u32 %s22, 2
      %s829 = sadd.s32 %s828, %s21
      %s830 = sadd.s32 %s21, 1
      %p831 = scmp.lt.s32.totalorder %s830, 0
      %s832 = ssub.s32 0, %s830
      %s833 = scalar_select %p831, %s832, %s830
      %s834 = sand.u32 %s833, 1
      %s835 = ssub.s32 0, %s834
      %s836 = scalar_select %p831, %s835, %s834
      %p837 = scmp.ne.s32.totalorder %s836, 0
      %p838 = scmp.lt.s32.totalorder %s836, 0
      %p839 = pnand %p838, %p837
      %p840 = pneg %p839
      %s841 = sadd.s32 %s836, 2
      %s842 = scalar_select %p840, %s841, %s836
      %s843 = ssub.s32 %s829, 1
      %p844 = scmp.gt.s32.totalorder %s843, %s842
      %s845 = scalar_select %p844, %s843, %s842
      %p846 = scmp.gt.s32.totalorder %s845, 0
      %s847 = scalar_select %p846, %s845, 0
      %p848 = scmp.lt.s32.totalorder %s847, 0
      %s849 = scalar_select %p848, %s847, 0
      %s850 = smul.u32 %s22, 2
      %s851 = sadd.s32 %s850, %s21
      %s852 = sadd.s32 %s21, 1
      %p853 = scmp.lt.s32.totalorder %s852, 0
      %s854 = ssub.s32 0, %s852
      %s855 = scalar_select %p853, %s854, %s852
      %s856 = sand.u32 %s855, 1
      %s857 = ssub.s32 0, %s856
      %s858 = scalar_select %p853, %s857, %s856
      %p859 = scmp.ne.s32.totalorder %s858, 0
      %p860 = scmp.lt.s32.totalorder %s858, 0
      %p861 = pnand %p860, %p859
      %p862 = pneg %p861
      %s863 = sadd.s32 %s858, 2
      %s864 = scalar_select %p862, %s863, %s858
      %s865 = ssub.s32 %s851, 1
      %p866 = scmp.gt.s32.totalorder %s865, %s864
      %s867 = scalar_select %p866, %s865, %s864
      %p868 = scmp.gt.s32.totalorder %s867, 0
      %s869 = scalar_select %p868, %s867, 0
      %p870 = scmp.lt.s32.totalorder %s869, 0
      %s871 = scalar_select %p870, %s869, 0
      %p872 = scmp.lt.s32.totalorder %s871, 0
      %s873 = scalar_select %p872, %s871, 0
      %s874 = smul.addr %s873, 8
      %s875 = scalar_lea.vmem %s3, %s874
      %s876 = smul.u32 %s22, 2
      %s877 = sadd.s32 %s876, %s21
      %s878 = sadd.s32 %s21, 1
      %p879 = scmp.lt.s32.totalorder %s878, 0
      %s880 = ssub.s32 0, %s878
      %s881 = scalar_select %p879, %s880, %s878
      %s882 = sand.u32 %s881, 1
      %s883 = ssub.s32 0, %s882
      %s884 = scalar_select %p879, %s883, %s882
      %p885 = scmp.ne.s32.totalorder %s884, 0
      %p886 = scmp.lt.s32.totalorder %s884, 0
      %p887 = pnand %p886, %p885
      %p888 = pneg %p887
      %s889 = sadd.s32 %s884, 2
      %s890 = scalar_select %p888, %s889, %s884
      %s891 = ssub.s32 %s877, 1
      %p892 = scmp.gt.s32.totalorder %s891, %s890
      %s893 = scalar_select %p892, %s891, %s890
      %p894 = scmp.gt.s32.totalorder %s893, 0
      %s895 = scalar_select %p894, %s893, 0
      %p896 = scmp.lt.s32.totalorder %s895, 0
      %s897 = scalar_select %p896, %s895, 0
      %p898 = scmp.lt.s32.totalorder %s21, 1
      %s899 = scalar_select %p898, %s21, 1
      %s900 = smul.addr %s899, 8
      %s901 = scalar_lea.vmem %s4, %s900
      %p902 = scmp.lt.s32.totalorder %s21, 1
      %s903 = scalar_select %p902, %s21, 1
      %s904 = smul.addr %s903, 8
      %s905 = scalar_lea.vmem %s5, %s904
      %s906 = smul.u32 %s22, 2
      %s907 = sadd.s32 %s906, %s21
      %p908 = scmp.eq.s32.totalorder %s22, 0
      // Predicated region
      $region37: #{loss_forward.1} parent=35 // pred_check
        %p909 = pneg %p908
      $region38: #{loss_forward.1} parent=35 // pred_check_branch
        %911 = sbr.rel (%p909) target = $region40
      $region39: #{loss_forward.1} parent=35 // pred_region
        %912 = vst [vmem:[#allocation2] sm:$0xff] 0.0
        %913 = vst [vmem:[#allocation3] sm:$0xff] 0.0
      $region40: #{loss_forward.1} parent=35 // pred_fallthru
        _
      %p914 = scmp.lt.s32.totalorder %s907, 1
      // Predicated region
      $region41: #{loss_forward.1} parent=35 // pred_check
        %p915 = pneg %p914
      $region42: #{loss_forward.1} parent=35 // pred_check_branch
        %917 = sbr.rel (%p915) target = $region44
      $region43: #{loss_forward.1} parent=35 // pred_region
        %v918 = vld [vmem:[%s731] sm:$0xff]
        %v919 = vld [vmem:[%s731 + $0x8] sm:$0xff]
        %v920 = vld [vmem:[%s779] sm:$0xff]
        %v921 = vld [vmem:[%s779 + $0x8] sm:$0xff]
        %v922 = vsub.f32 %v918, %v920
        %v923 = vsub.f32 %v919, %v921
        %v924 = vand.u32 2147483647, %v922
        %v925 = vand.u32 2147483647, %v923
        %v926 = vld [vmem:[#allocation2] sm:$0xff]
        %v927 = vadd.f32 %v924, %v925
        %v928 = vadd.f32 %v926, %v927
        %929 = vst [vmem:[#allocation2] sm:$0xff] %v928
      $region44: #{loss_forward.1} parent=35 // pred_fallthru
        _
      %p930 = scmp.ge.s32.totalorder %s907, 1
      %p931 = scmp.lt.s32.totalorder %s907, 2
      %p932 = pnand %p930, %p931
      %p933 = pneg %p932
      // Predicated region
      $region45: #{loss_forward.1} parent=35 // pred_check
        _
      $region46: #{loss_forward.1} parent=35 // pred_check_branch
        %935 = sbr.rel (%p932) target = $region48
      $region47: #{loss_forward.1} parent=35 // pred_region
        %v936 = vld [vmem:[%s827] sm:$0xff]
        %v937 = vld [vmem:[%s875] sm:$0xff]
        %v938 = vsub.f32 %v936, %v937
        %v939 = vand.u32 2147483647, %v938
        %v940 = vld [vmem:[#allocation3] sm:$0xff]
        %v941 = vadd.f32 %v939, 0.0
        %v942 = vadd.f32 %v940, %v941
        %943 = vst [vmem:[#allocation3] sm:$0xff] %v942
      $region48: #{loss_forward.1} parent=35 // pred_fallthru
        _
      // Predicated region
      $region49: #{loss_forward.1} parent=35 // pred_check
        %p944 = pneg %p908
      $region50: #{loss_forward.1} parent=35 // pred_check_branch
        %946 = sbr.rel (%p944) target = $region52
      $region51: #{loss_forward.1} parent=35 // pred_region
        %v947 = vld [vmem:[#allocation2] sm:$0xff]
        %948 = vst [vmem:[%s901] sm:$0xff] %v947
        %v949 = vld [vmem:[#allocation3] sm:$0xff]
        %950 = vst [vmem:[%s905] sm:$0xff] %v949
      $region52: #{loss_forward.1} parent=35 // pred_fallthru
        _
      %p951 = scmp.lt.s32.totalorder %s21, 1
      %s952 = scalar_select %p951, %s21, 1
      %s953 = smul.addr %s952, 8
      %s954 = scalar_lea.vmem %s4, %s953
      %p955 = scmp.lt.s32.totalorder %s21, 1
      %s956 = scalar_select %p955, %s21, 1
      %s957 = smul.addr %s956, 8
      %s958 = scalar_lea.vmem %s5, %s957
      // Predicated region
      $region53: #{loss_forward.1} parent=35 // pred_check
        %p959 = pneg %p323
      $region54: #{loss_forward.1} parent=35 // pred_check_branch
        %961 = sbr.rel (%p959) target = $region56
      $region55: #{loss_forward.1} parent=35 // pred_region
        _
      $region56: #{loss_forward.1} parent=35 // pred_fallthru
        _
      // Predicated region
      $region57: #{loss_forward.1} parent=35 // pred_check
        %p962 = pneg %p349
      $region58: #{loss_forward.1} parent=35 // pred_check_branch
        %964 = sbr.rel (%p962) target = $region60
      $region59: #{loss_forward.1} parent=35 // pred_region
        _
      $region60: #{loss_forward.1} parent=35 // pred_fallthru
        _
    $region36: #{loss_forward.1} parent=5 // pred_fallthru
      _
    %p965 = scmp.le.s32.totalorder 2, %s12
    // Predicated region
    $region61: #{loss_forward.1} parent=5 // pred_check
      %p966 = pneg %p965
    $region62: #{loss_forward.1} parent=5 // pred_check_branch
      %968 = sbr.rel (%p966) target = $region64
    $region63: #{loss_forward.1} parent=5 // pred_region
      %s969 = ssub.s32 %s12, 2
      // Predicated region
      $region65: #{loss_forward.1} parent=63 // pred_check
        %p970 = pneg %p329
      $region66: #{loss_forward.1} parent=63 // pred_check_branch
        %972 = sbr.rel (%p970) target = $region68
      $region67: #{loss_forward.1} parent=63 // pred_region
        %p973 = scmp.lt.s32.totalorder %s23, 1
        %s974 = scalar_select %p973, %s23, 1
        %s975 = smul.addr %s974, 8
        %s976 = scalar_lea.vmem %s4, %s975
      $region68: #{loss_forward.1} parent=63 // pred_fallthru
        _
      // Predicated region
      $region69: #{loss_forward.1} parent=63 // pred_check
        %p977 = pneg %p355
      $region70: #{loss_forward.1} parent=63 // pred_check_branch
        %979 = sbr.rel (%p977) target = $region72
      $region71: #{loss_forward.1} parent=63 // pred_region
        %p980 = scmp.lt.s32.totalorder %s23, 1
        %s981 = scalar_select %p980, %s23, 1
        %s982 = smul.addr %s981, 8
        %s983 = scalar_lea.vmem %s5, %s982
      $region72: #{loss_forward.1} parent=63 // pred_fallthru
        _
    $region64: #{loss_forward.1} parent=5 // pred_fallthru
      _
  $region6: #{loss_forward.1} parent=0 // loop_footer
    %s16 = sadd.s32 1, %s12
  $region7: #{loss_forward.1} parent=0 // loop_footer_branch
    %11 = sbr.rel target = $region3
  $region8: #{loss_forward.1} parent=0 // loop_exit
    _

</llo_original>
